<compile_context>
chip_gen: v6e
topology: v6e:2x2x1
jax: 0.10.0
libtpu: 0.0.40
codegen_flags: <defaults>
</compile_context>

<pallas_src>
import functools

import jax
import jax.numpy as jnp
from jax.experimental import pallas as pl
from jax.experimental.pallas import tpu as pltpu


def _round_up(x, m):
    return ((x + m - 1) // m) * m


def _skipgram_kernel(num_nodes, nn_pad,
                     emb_ref, wd_ref, bd_ref, tgt_ref,   # inputs
                     o_ref):                             # per-row loss output
    row_tile = emb_ref.shape[0]

    # ---- decoder linear on the MXU: bf16 operands, f32 accumulation.
    # Padded lanes of the bias already hold -1e30, so no logits mask is needed.
    logits = jnp.dot(emb_ref[...], wd_ref[...],
                     preferred_element_type=jnp.float32) + bd_ref[...]

    # ---- first softmax (nn.Softmax(dim=1) inside the decoder)
    m1 = jnp.max(logits, axis=-1, keepdims=True)
    e1 = jnp.exp(logits - m1)                 # padded lanes underflow to exactly 0
    s1 = jnp.sum(e1, axis=-1, keepdims=True)
    probs = e1 / s1                           # exact divide (tiny, keeps parity)

    col = jax.lax.broadcasted_iota(jnp.int32, (row_tile, nn_pad), 1)

    # ---- CrossEntropyLoss(probs, target) = logsumexp(probs) - probs[target]
    # (reproduces PyTorch's softmax-then-CE composition exactly)
    # TODO(synk): if the double-softmax semantics are ever negotiable, drop the
    # first softmax and compute standard CE on logits (halves EUP volume).
    m2 = jnp.max(probs, axis=-1, keepdims=True)
    e2 = jnp.exp(probs - m2)
    if nn_pad != num_nodes:
        e2 = jnp.where(col < num_nodes, e2, 0.0)   # padded lanes hold exp(-m2) != 0
    lse = jnp.log(jnp.sum(e2, axis=-1, keepdims=True)) + m2
    picked = jnp.sum(jnp.where(col == tgt_ref[...], probs, 0.0),
                     axis=-1, keepdims=True)

    o_ref[...] = lse - picked


def skipgram_loss(target, rw, w_enc, b_enc, w_dec, b_dec, num_nodes, *, row_tile=None):
    """target: [B] int32, rw: [B, walk_len] int32. Returns scalar loss."""
    walk_len = rw.shape[1]
    n_rows = rw.shape[0] * walk_len
    enc_dim = w_enc.shape[0]

    enc_pad = _round_up(enc_dim, 128)
    nn_pad = _round_up(num_nodes, 128)

    if row_tile is None:
        # Regime heuristic: big tiles amortize the ~0.35us/step grid overhead
        # for small vocabularies; for large vocabularies cap the ~5 live
        # (row_tile, nn_pad) f32 softmax temporaries. Multiple of 16 keeps
        # bf16 input blocks on native (16,128) tiling.
        temps_budget = 8 * 1024 * 1024
        rt = temps_budget // (5 * nn_pad * 4)
        rt = max(16, min(512, (rt // 16) * 16))
        row_tile = min(rt, _round_up(n_rows, 16))
    assert row_tile % 16 == 0

    n_pad = _round_up(n_rows, row_tile)
    n_tiles = n_pad // row_tile

    f32, bf16 = jnp.float32, jnp.bfloat16

    rw_flat = rw.reshape(-1).astype(jnp.int32)
    rw_pad = jnp.zeros((n_pad,), jnp.int32).at[:n_rows].set(rw_flat)
    target_rep = jnp.repeat(target.astype(jnp.int32), walk_len)    # repeat_interleave
    tgt_pad = jnp.zeros((n_pad, 1), jnp.int32).at[:n_rows, 0].set(target_rep)

    # ---- encoder: one_hot(rw) @ W_enc^T + b_enc == row gather of W_enc^T (+ bias),
    # done as a cheap XLA gather in the wrapper and streamed in as bf16 tiles.
    w_enc_t = jnp.zeros((num_nodes, enc_pad), f32).at[:, :enc_dim].set(w_enc.T.astype(f32))
    b_enc_p = jnp.zeros((enc_pad,), f32).at[:enc_dim].set(b_enc.astype(f32))
    emb = (w_enc_t[rw_pad] + b_enc_p).astype(bf16)                  # (n_pad, enc_pad)

    # ---- decoder weights: bf16 on the MXU (f32 accumulation in-kernel).
    w_dec_t = jnp.zeros((enc_pad, nn_pad), bf16).at[:enc_dim, :num_nodes].set(
        w_dec.T.astype(bf16))
    # Bias stays f32; padded lanes carry -1e30 so the kernel needs no logit mask.
    b_dec_p = jnp.full((1, nn_pad), -1e30, f32).at[0, :num_nodes].set(b_dec.astype(f32))

    # Per-generation VMEM budget (v7x: 64 MiB/TC, v5e/v6e: 128 MiB).
    try:
        vmem_cap = pltpu.get_tpu_info().vmem_capacity_bytes
    except Exception:
        vmem_cap = 64 * 1024 * 1024
    vmem_limit = min(int(vmem_cap * 3 // 4), 100 * 1024 * 1024)

    kernel = functools.partial(_skipgram_kernel, num_nodes, nn_pad)

    grid_spec = pltpu.PrefetchScalarGridSpec(
        num_scalar_prefetch=0,
        grid=(n_tiles,),
        in_specs=[
            pl.BlockSpec((row_tile, enc_pad), lambda i: (i, 0)),   # emb rows (pipelined)
            pl.BlockSpec((enc_pad, nn_pad), lambda i: (0, 0)),     # W_dec^T (resident)
            pl.BlockSpec((1, nn_pad), lambda i: (0, 0)),           # b_dec (+ -1e30 pad)
            pl.BlockSpec((row_tile, 1), lambda i: (i, 0)),         # per-row targets
        ],
        out_specs=pl.BlockSpec((row_tile, 1), lambda i: (i, 0)),   # per-row loss
    )

    per_row = pl.pallas_call(
        kernel,
        out_shape=jax.ShapeDtypeStruct((n_pad, 1), f32),
        grid_spec=grid_spec,
        compiler_params=pltpu.CompilerParams(
            # Row tiles are independent (reduction happens in the wrapper), so
            # the grid axis is "parallel" -> megacore sharding on v7x.
            dimension_semantics=("parallel",),
            vmem_limit_bytes=vmem_limit,
        ),
    )(emb, w_dec_t, b_dec_p, tgt_pad)

    return jnp.sum(per_row[:n_rows, 0]) / jnp.float32(n_rows)


def skipgram_loss_ref(target, rw, w_enc, b_enc, w_dec, b_dec, num_nodes):
    walk_len = rw.shape[1]
    target_rep = jnp.repeat(target, walk_len)
    x = jax.nn.one_hot(rw.reshape(-1), num_nodes, dtype=jnp.float32)
    walk_emb = x @ w_enc.T + b_enc
    logits = walk_emb @ w_dec.T + b_dec
    probs = jax.nn.softmax(logits, axis=1)
    logp = jax.nn.log_softmax(probs, axis=1)
    nll = -logp[jnp.arange(target_rep.shape[0]), target_rep]
    return jnp.mean(nll)


if __name__ == "__main__":
    num_nodes = 16
    enc_dim = 32
    batch = 2
    walk_len = 4

    key = jax.random.PRNGKey(0)
    k1, k2, k3, k4, k5, k6 = jax.random.split(key, 6)

    # deterministic parameter init (Linear: weight [out, in], bias [out])
    w_enc = jax.random.uniform(k1, (enc_dim, num_nodes), jnp.float32, -0.25, 0.25)
    b_enc = jax.random.uniform(k2, (enc_dim,), jnp.float32, -0.25, 0.25)
    w_dec = jax.random.uniform(k3, (num_nodes, enc_dim), jnp.float32, -0.2, 0.2)
    b_dec = jax.random.uniform(k4, (num_nodes,), jnp.float32, -0.2, 0.2)

    target = jax.random.randint(k5, (batch,), 0, num_nodes, dtype=jnp.int32)
    rw = jax.random.randint(k6, (batch, walk_len), 0, num_nodes, dtype=jnp.int32)

    loss = skipgram_loss(target, rw, w_enc, b_enc, w_dec, b_dec, num_nodes)
    loss = jax.block_until_ready(loss)

    ref = skipgram_loss_ref(target, rw, w_enc, b_enc, w_dec, b_dec, num_nodes)
    # Tolerance reflects the bf16 MXU operands (accumulation and all softmax
    # math stay f32); at these magnitudes the deviation is well under 1e-3.
    assert jnp.allclose(loss, ref, atol=5e-3, rtol=5e-3), (loss, ref)

    print("KERNEL_OK")
</pallas_src>

<mosaic_0001>
module attributes {stable_mosaic.version = 11 : i64} {
  func.func @_skipgram_kernel(%arg0: i32, %arg1: memref<16x128xbf16, #tpu.memory_space<vmem>>, %arg2: memref<128x128xbf16, #tpu.memory_space<vmem>>, %arg3: memref<1x128xf32, #tpu.memory_space<vmem>>, %arg4: memref<16x1xi32, #tpu.memory_space<vmem>>, %arg5: memref<16x1xf32, #tpu.memory_space<vmem>>) attributes {dimension_semantics = [#tpu.dimension_semantics<parallel>], iteration_bounds = array<i64: 1>, scalar_prefetch = 0 : i64, scratch_operands = 0 : i64, tpu.core_type = #tpu.core_type<tc>, window_params = [{transform_indices = @transform_0, window_bounds = array<i64: 16, 128>}, {pipeline_mode = #tpu.pipeline_mode<synchronous>, transform_indices = @transform_1, window_bounds = array<i64: 128, 128>}, {pipeline_mode = #tpu.pipeline_mode<synchronous>, transform_indices = @transform_2, window_bounds = array<i64: 1, 128>}, {transform_indices = @transform_3, window_bounds = array<i64: 16, 1>}, {transform_indices = @transform_4, window_bounds = array<i64: 16, 1>}]} {
    %c0 = arith.constant 0 : index
    %c0_0 = arith.constant 0 : index
    %0 = vector.load %arg1[%c0, %c0_0] : memref<16x128xbf16, #tpu.memory_space<vmem>>, vector<16x128xbf16>
    %c0_1 = arith.constant 0 : index
    %c0_2 = arith.constant 0 : index
    %1 = vector.load %arg2[%c0_1, %c0_2] : memref<128x128xbf16, #tpu.memory_space<vmem>>, vector<128x128xbf16>
    %cst = arith.constant dense<0.000000e+00> : vector<16x128xf32>
    %2 = tpu.matmul %0, %1, %cst {dimension_numbers = #tpu.dot_dimension_numbers<[1], [0], [0], [1], [0, 0, 1, 1], [], []>} : vector<16x128xbf16>, vector<128x128xbf16>, vector<16x128xf32> -> vector<16x128xf32>
    %c0_3 = arith.constant 0 : index
    %c0_4 = arith.constant 0 : index
    %3 = vector.load %arg3[%c0_3, %c0_4] : memref<1x128xf32, #tpu.memory_space<vmem>>, vector<1x128xf32>
    %4 = vector.broadcast %3 : vector<1x128xf32> to vector<16x128xf32>
    %5 = arith.addf %2, %4 : vector<16x128xf32>
    %cst_5 = arith.constant dense<0xFF800000> : vector<16xf32>
    %6 = vector.multi_reduction <maximumf>, %5, %cst_5 [1] : vector<16x128xf32> to vector<16xf32>
    %7 = vector.shape_cast %6 : vector<16xf32> to vector<16x1xf32>
    %8 = vector.broadcast %7 : vector<16x1xf32> to vector<16x128xf32>
    %9 = arith.subf %5, %8 : vector<16x128xf32>
    %10 = math.exp %9 : vector<16x128xf32>
    %cst_6 = arith.constant dense<0.000000e+00> : vector<16xf32>
    %11 = vector.multi_reduction <add>, %10, %cst_6 [1] : vector<16x128xf32> to vector<16xf32>
    %12 = vector.shape_cast %11 : vector<16xf32> to vector<16x1xf32>
    %13 = vector.broadcast %12 : vector<16x1xf32> to vector<16x128xf32>
    %14 = arith.divf %10, %13 : vector<16x128xf32>
    %15 = tpu.iota {dimensions = array<i32: 1>} : vector<16x128xi32>
    %cst_7 = arith.constant dense<0xFF800000> : vector<16xf32>
    %16 = vector.multi_reduction <maximumf>, %14, %cst_7 [1] : vector<16x128xf32> to vector<16xf32>
    %17 = vector.shape_cast %16 : vector<16xf32> to vector<16x1xf32>
    %18 = vector.broadcast %17 : vector<16x1xf32> to vector<16x128xf32>
    %19 = arith.subf %14, %18 : vector<16x128xf32>
    %20 = math.exp %19 : vector<16x128xf32>
    %c16_i32 = arith.constant 16 : i32
    %21 = vector.broadcast %c16_i32 : i32 to vector<16x128xi32>
    %22 = arith.cmpi slt, %15, %21 : vector<16x128xi32>
    %cst_8 = arith.constant 0.000000e+00 : f32
    %23 = vector.broadcast %cst_8 : f32 to vector<16x128xf32>
    %24 = arith.select %22, %20, %23 : vector<16x128xi1>, vector<16x128xf32>
    %cst_9 = arith.constant dense<0.000000e+00> : vector<16xf32>
    %25 = vector.multi_reduction <add>, %24, %cst_9 [1] : vector<16x128xf32> to vector<16xf32>
    %26 = vector.shape_cast %25 : vector<16xf32> to vector<16x1xf32>
    %27 = math.log %26 : vector<16x1xf32>
    %28 = arith.addf %27, %17 : vector<16x1xf32>
    %c0_10 = arith.constant 0 : index
    %c0_11 = arith.constant 0 : index
    %29 = vector.load %arg4[%c0_10, %c0_11] : memref<16x1xi32, #tpu.memory_space<vmem>>, vector<16x1xi32>
    %30 = vector.broadcast %29 : vector<16x1xi32> to vector<16x128xi32>
    %31 = arith.cmpi eq, %15, %30 : vector<16x128xi32>
    %cst_12 = arith.constant 0.000000e+00 : f32
    %32 = vector.broadcast %cst_12 : f32 to vector<16x128xf32>
    %33 = arith.select %31, %14, %32 : vector<16x128xi1>, vector<16x128xf32>
    %cst_13 = arith.constant dense<0.000000e+00> : vector<16xf32>
    %34 = vector.multi_reduction <add>, %33, %cst_13 [1] : vector<16x128xf32> to vector<16xf32>
    %35 = vector.shape_cast %34 : vector<16xf32> to vector<16x1xf32>
    %36 = arith.subf %28, %35 : vector<16x1xf32>
    %c0_14 = arith.constant 0 : index
    %c0_15 = arith.constant 0 : index
    %37 = vector.load %arg5[%c0_14, %c0_15] : memref<16x1xf32, #tpu.memory_space<vmem>>, vector<16x1xf32>
    tpu.vector_store %arg5[%c0_14, %c0_15], %36 {strides = array<i32>} : memref<16x1xf32, #tpu.memory_space<vmem>>, vector<16x1xf32>,
    return
  }
  func.func @transform_0(%arg0: i32) -> (i32, i32) {
    %c0_i32 = arith.constant 0 : i32
    %c0_i32_0 = arith.constant 0 : i32
    return %arg0, %c0_i32 : i32, i32
  }
  func.func @transform_1(%arg0: i32) -> (i32, i32) {
    %c0_i32 = arith.constant 0 : i32
    %c0_i32_0 = arith.constant 0 : i32
    %c0_i32_1 = arith.constant 0 : i32
    return %c0_i32, %c0_i32_0 : i32, i32
  }
  func.func @transform_2(%arg0: i32) -> (i32, i32) {
    %c0_i32 = arith.constant 0 : i32
    %c0_i32_0 = arith.constant 0 : i32
    %c0_i32_1 = arith.constant 0 : i32
    return %c0_i32, %c0_i32_0 : i32, i32
  }
  func.func @transform_3(%arg0: i32) -> (i32, i32) {
    %c0_i32 = arith.constant 0 : i32
    %c0_i32_0 = arith.constant 0 : i32
    return %arg0, %c0_i32 : i32, i32
  }
  func.func @transform_4(%arg0: i32) -> (i32, i32) {
    %c0_i32 = arith.constant 0 : i32
    %c0_i32_0 = arith.constant 0 : i32
    return %arg0, %c0_i32 : i32, i32
  }
}

</mosaic_0001>

<llo_original>
// kernel: tpu_custom_call.1
$region0: #{tpu_custom_call.1}
  #allocation0 [shape = 'u32[]', space=smem, size = 0x4, offset = 0x4, fixed_abs, tag = 'smem constant byte address 0x4 - core index']
  #allocation1 [shape = 'u32[144,128]{1,0:T(1,128)}', space=vmem, size = 0x12000, scoped, tag = 'internal scratch']
  %s0 = inlined_call_operand.vmem [shape: bf16[16,128], index: 0, kind: input, shape index: {}]
  %s1 = inlined_call_operand.hbm [shape: bf16[128,128], index: 1, kind: input, shape index: {}]
  %s2 = inlined_call_operand.vmem [shape: f32[1,128], index: 2, kind: input, shape index: {}]
  %s3 = inlined_call_operand.vmem [shape: s32[16,1], index: 3, kind: input, shape index: {}]
  %s4 = inlined_call_operand.vmem [shape: f32[16,1], index: 4, kind: output, shape index: {}]
  %s5 = sld [smem:[#allocation0]]
  $region30: #{tpu_custom_call.1} parent=0
    _
  %s7 = ssub.s32 1, %s5
  %s8 = scalar_select 0, %s7, %s5
  $region1: #{tpu_custom_call.1} parent=0
    #allocation2 [shape = 'u8[32768]{0}', space=vmem, size = 0x8000, scoped, tag = 'input window, operand 1, single buffered']
    #allocation3 [shape = 's32[1]{0}', space=sflag, size = 0x4, scoped, tag = 'scoped memory for tpu_custom_call.1']
    %9 = vsyncpa [#allocation3], 0
    // Predicated region
    $region2: #{tpu_custom_call.1} parent=1 // pred_check
      _
    $region3: #{tpu_custom_call.1} parent=1 // pred_check_branch
      %11 = sbr.rel (0) target = $region5
    $region4: #{tpu_custom_call.1} parent=1 // pred_region
      _
    $region5: #{tpu_custom_call.1} parent=1 // pred_fallthru
      _
    // Predicated region
    $region6: #{tpu_custom_call.1} parent=1 // pred_check
      _
    $region7: #{tpu_custom_call.1} parent=1 // pred_check_branch
      %13 = sbr.rel (0) target = $region9
    $region8: #{tpu_custom_call.1} parent=1 // pred_region
      %s15 = ssub.s32 1024, 1024
      %16 = vsyncadd [#allocation3], %s15
      %s17 = sshll.u32 [#allocation2], 4
      %s18 = int_to_ptr.vmem [resolvable:$true] %s17
      %23 = dma.hbm_to_vmem [thread:$0]  %s1, 1024, %s18, [#allocation3], 64, 64, 4
    $region9: #{tpu_custom_call.1} parent=1 // pred_fallthru
      _
    // Predicated region
    $region10: #{tpu_custom_call.1} parent=1 // pred_check
      _
    $region11: #{tpu_custom_call.1} parent=1 // pred_check_branch
      %25 = sbr.rel (0) target = $region13
    $region12: #{tpu_custom_call.1} parent=1 // pred_region
      _
    $region13: #{tpu_custom_call.1} parent=1 // pred_fallthru
      _
    // Predicated region
    $region14: #{tpu_custom_call.1} parent=1 // pred_check
      _
    $region15: #{tpu_custom_call.1} parent=1 // pred_check_branch
      %27 = sbr.rel (0) target = $region17
    $region16: #{tpu_custom_call.1} parent=1 // pred_region
      _
    $region17: #{tpu_custom_call.1} parent=1 // pred_fallthru
      _
    // Predicated region
    $region18: #{tpu_custom_call.1} parent=1 // pred_check
      _
    $region19: #{tpu_custom_call.1} parent=1 // pred_check_branch
      %29 = sbr.rel (0) target = $region21
    $region20: #{tpu_custom_call.1} parent=1 // pred_region
      %30 = dma.done [#allocation3], 1024
    $region21: #{tpu_custom_call.1} parent=1 // pred_fallthru
      _
    %v32 = vld [vmem:[%s0] sm:$0xf]
    %v33 = vld [vmem:[%s0 + $0x4] sm:$0xf]
    %v34 = vld [vmem:[#allocation2] sm:$0xf]
    %v35 = vld [vmem:[#allocation2 + $0x4] sm:$0xf]
    %v36 = vld [vmem:[#allocation2 + $0x8] sm:$0xf]
    %v37 = vld [vmem:[#allocation2 + $0xc] sm:$0xf]
    %v38 = vld [vmem:[#allocation2 + $0x10] sm:$0xf]
    %v39 = vld [vmem:[#allocation2 + $0x14] sm:$0xf]
    %v40 = vld [vmem:[#allocation2 + $0x18] sm:$0xf]
    %v41 = vld [vmem:[#allocation2 + $0x1c] sm:$0xf]
    %v42 = vld [vmem:[#allocation2 + $0x20] sm:$0xf]
    %v43 = vld [vmem:[#allocation2 + $0x24] sm:$0xf]
    %v44 = vld [vmem:[#allocation2 + $0x28] sm:$0xf]
    %v45 = vld [vmem:[#allocation2 + $0x2c] sm:$0xf]
    %v46 = vld [vmem:[#allocation2 + $0x30] sm:$0xf]
    %v47 = vld [vmem:[#allocation2 + $0x34] sm:$0xf]
    %v48 = vld [vmem:[#allocation2 + $0x38] sm:$0xf]
    %v49 = vld [vmem:[#allocation2 + $0x3c] sm:$0xf]
    %v50 = vld [vmem:[%s2] sm:$0x1]
    %v52 = vlaneseq
    %v53 = vshrl.u32 %v52, 7
    %v54 = vsub.s32 0, %v53
    %v55 = vrot.slane %v50, %v54
    %v59 = vunpack.c.l.b16 %v32
    %v60 = vunpack.c.l.b16 %v33
    %v61 = vpack.c.b16 %v60, %v59
    %v79 = vunpack.c.l.b16 %v34
    %v80 = vunpack.c.l.b16 %v35
    %v81 = vunpack.c.l.b16 %v36
    %v82 = vunpack.c.l.b16 %v37
    %v83 = vunpack.c.l.b16 %v38
    %v84 = vunpack.c.l.b16 %v39
    %v85 = vunpack.c.l.b16 %v40
    %v86 = vunpack.c.l.b16 %v41
    %v87 = vunpack.c.l.b16 %v42
    %v88 = vunpack.c.l.b16 %v43
    %v89 = vunpack.c.l.b16 %v44
    %v90 = vunpack.c.l.b16 %v45
    %v91 = vunpack.c.l.b16 %v46
    %v92 = vunpack.c.l.b16 %v47
    %v93 = vunpack.c.l.b16 %v48
    %v94 = vunpack.c.l.b16 %v49
    %v95 = vpack.c.b16 %v80, %v79
    %v96 = vpack.c.b16 %v82, %v81
    %v97 = vpack.c.b16 %v84, %v83
    %v98 = vpack.c.b16 %v86, %v85
    %v99 = vpack.c.b16 %v88, %v87
    %v100 = vpack.c.b16 %v90, %v89
    %v101 = vpack.c.b16 %v92, %v91
    %v102 = vpack.c.b16 %v94, %v93
    %111 = vmatprep.subr.bf16.mxu0 0
    %112 = vmatpush1.bf16.msra.mxu0 %v102
    %113 = vmatprep.subr.bf16.mxu0 0
    %114 = vmatpush1.bf16.msra.mxu0 %v101
    %115 = vmatprep.subr.bf16.mxu0 0
    %116 = vmatpush1.bf16.msra.mxu0 %v100
    %117 = vmatprep.subr.bf16.mxu0 0
    %118 = vmatpush1.bf16.msra.mxu0 %v99
    %119 = vmatprep.subr.bf16.mxu0 0
    %120 = vmatpush1.bf16.msra.mxu0 %v98
    %121 = vmatprep.subr.bf16.mxu0 0
    %122 = vmatpush1.bf16.msra.mxu0 %v97
    %123 = vmatprep.subr.bf16.mxu0 0
    %124 = vmatpush1.bf16.msra.mxu0 %v96
    %125 = vmatprep.subr.bf16.mxu0 0
    %126 = vmatpush1.bf16.msra.mxu0 %v95
    %127 = vmatprep.subr.bf16.mxu0 0
    %128 = vmatpush2.bf16.msra.mxu0 0
    %129 = vmatprep.subr.bf16.mxu0 0
    %130 = vmatpush2.bf16.msra.mxu0 0
    %131 = vmatprep.subr.bf16.mxu0 0
    %132 = vmatpush2.bf16.msra.mxu0 0
    %133 = vmatprep.subr.bf16.mxu0 0
    %134 = vmatpush2.bf16.msra.mxu0 0
    %135 = vmatprep.subr.bf16.mxu0 0
    %136 = vmatpush2.bf16.msra.mxu0 0
    %137 = vmatprep.subr.bf16.mxu0 0
    %138 = vmatpush2.bf16.msra.mxu0 0
    %139 = vmatprep.subr.bf16.mxu0 0
    %140 = vmatpush2.bf16.msra.mxu0 0
    %141 = vmatprep.subr.bf16.mxu0 0
    %142 = vmatpush2.bf16.msra.mxu0 0
    %143 = vmatprep.mubr.bf16.mxu0 0
    %144 = vmatmul.mubr.bf16.gmra.mxu0 %v61
    %v145 = vpop.f32.mrf.mxu0
    %v146 = vadd.f32 %v55, %v145
    %v147 = vpop.f32.mrf.mxu0
    %v148 = vpop.f32.mrf.mxu0
    %v149 = vadd.f32 %v55, %v148
    %v150 = vpop.f32.mrf.mxu0
    %151 = vdwg.mxu0
    %152 = vmax.xlane.f32.xlu0 %v146
    %v153 = vpop.xlane.xlu0 %152
    %154 = vmax.xlane.f32.xlu0 %v149
    %v155 = vpop.xlane.xlu0 %154
    %v156 = vsub.f32 %v146, %v153
    %v157 = vsub.f32 %v149, %v155
    %v158 = vmul.f32 %v156, 1.442695
    %v159 = vpow.pop %v158
    %v160 = vmul.f32 %v157, 1.442695
    %v161 = vpow.pop %v160
    %162 = vadd.xlane.f32.xlu0 %v159
    %v163 = vpop.xlane.xlu0 %162
    %164 = vadd.xlane.f32.xlu0 %v161
    %v165 = vpop.xlane.xlu0 %164
    %v166 = vrcp.pop %v163
    %v167 = vmul.f32 %v159, %v166
    %v168 = vrcp.pop %v165
    %v169 = vmul.f32 %v161, %v168
    %v170 = vlaneseq
    %v171 = vand.u32 %v170, 127
    %172 = vmax.xlane.f32.xlu0 %v167
    %v173 = vpop.xlane.xlu0 %172
    %174 = vmax.xlane.f32.xlu0 %v169
    %v175 = vpop.xlane.xlu0 %174
    %v176 = vsub.f32 %v167, %v173
    %v177 = vsub.f32 %v169, %v175
    %v178 = vmul.f32 %v176, 1.442695
    %v179 = vpow.pop %v178
    %v180 = vmul.f32 %v177, 1.442695
    %v181 = vpow.pop %v180
    %vm182 = vcmp.lt.s32.totalorder %v171, 16
    %v183 = vsel %vm182, %v179, 0.0
    %v184 = vsel %vm182, %v181, 0.0
    %185 = vadd.xlane.f32.xlu0 %v183
    %v186 = vpop.xlane.xlu0 %185
    %187 = vadd.xlane.f32.xlu0 %v184
    %v188 = vpop.xlane.xlu0 %187
    %v189 = vlog2.pop %v186
    %v190 = vmul.f32 %v189, 0.6931472
    %v191 = vlog2.pop %v188
    %v192 = vmul.f32 %v191, 0.6931472
    %v193 = vadd.f32 %v190, %v173
    %v194 = vadd.f32 %v192, %v175
    %v195 = vld [vmem:[%s3] sm:$0xff]
    %v196 = vld [vmem:[%s3 + $0x8] sm:$0xff]
    %197 = vset.pattern.permute.xlu0 0
    %198 = vperm.xlu0 %197, %v195
    %v199 = vpop.permute.xlu0 %198
    %200 = vset.pattern.permute.xlu0 0
    %201 = vperm.xlu0 %200, %v196
    %v202 = vpop.permute.xlu0 %201
    %vm203 = vcmp.eq.s32.totalorder %v171, %v199
    %vm204 = vcmp.eq.s32.totalorder %v171, %v202
    %v205 = vsel %vm203, %v167, 0.0
    %v206 = vsel %vm204, %v169, 0.0
    %207 = vadd.xlane.f32.xlu0 %v205
    %v208 = vpop.xlane.xlu0 %207
    %209 = vadd.xlane.f32.xlu0 %v206
    %v210 = vpop.xlane.xlu0 %209
    %v211 = vsub.f32 %v193, %v208
    %v212 = vsub.f32 %v194, %v210
    %vm213 = vcmask 7168
    %214 = vst.msk [vmem:[%s4] sm:$0xff] %vm213, %v211
    %215 = vst.msk [vmem:[%s4 + $0x8] sm:$0xff] %vm213, %v212
    // Predicated region
    $region22: #{tpu_custom_call.1} parent=1 // pred_check
      _
    $region23: #{tpu_custom_call.1} parent=1 // pred_check_branch
      %217 = sbr.rel (0) target = $region25
    $region24: #{tpu_custom_call.1} parent=1 // pred_region
      _
    $region25: #{tpu_custom_call.1} parent=1 // pred_fallthru
      _
    // Predicated region
    $region26: #{tpu_custom_call.1} parent=1 // pred_check
      _
    $region27: #{tpu_custom_call.1} parent=1 // pred_check_branch
      %219 = sbr.rel (0) target = $region29
    $region28: #{tpu_custom_call.1} parent=1 // pred_region
      _
    $region29: #{tpu_custom_call.1} parent=1 // pred_fallthru
      _
    %220 = vsyncpa [#allocation3], 1

</llo_original>
